<compile_context>
chip_gen: v7x
topology: tpu7x:2x2x1
jax: 0.10.0
libtpu: 0.0.40
codegen_flags: <defaults>
</compile_context>

<pallas_src>
import jax
import jax.numpy as jnp
from jax.experimental import pallas as pl
from jax.experimental.pallas import tpu as pltpu

LANE = 128                                  # TPU lane width (output channel padding target)
TILE_M = 256                                # row tile for the large-M gridded fallback
_WHOLE_ARRAY_BYTES_LIMIT = 8 * 1024 * 1024  # x+out bytes above which we switch to the grid path


def _conv1x1_kernel(x_ref, w_ref, o_ref):
    # x_ref: [M, Cin+1] (last column is constant 1.0 -> bias folded into the matmul)
    # w_ref: [Cin+1, Cout_pad] (last row is the bias), o_ref: [M, Cout_pad]
    o_ref[...] = jnp.dot(
        x_ref[...], w_ref[...], preferred_element_type=jnp.float32
    ).astype(o_ref.dtype)


def prepare_params(weight, bias):
    """One-time parameter prep (hoisted out of the per-call path).

    weight: [Cout, Cin, 1, 1] (PyTorch Conv2d layout), bias: [Cout]
    returns w_aug [Cin+1, Cout_pad]: transposed weights with the bias folded in as the
    last row, output channels zero-padded to a multiple of 128 (lane-dense stores).
    """
    Cout, Cin = weight.shape[0], weight.shape[1]
    cout_pad = ((Cout + LANE - 1) // LANE) * LANE
    w2d = weight.reshape(Cout, Cin).T  # [Cin, Cout]
    w_aug = jnp.zeros((Cin + 1, cout_pad), weight.dtype)
    w_aug = w_aug.at[:Cin, :Cout].set(w2d)
    w_aug = w_aug.at[Cin, :Cout].set(bias)
    return w_aug


def conv2d_1x1(x_nchw, w_aug, cout):
    """1x1 conv, stride 1, using pre-prepared (transposed, bias-folded, lane-padded) params.

    x_nchw: [N, Cin, H, W]; w_aug: [Cin+1, Cout_pad]; returns [N, cout, H, W].
    """
    N, Cin, H, W = x_nchw.shape
    cin_aug, cout_pad = w_aug.shape
    M = N * H * W

    # Flatten batch/spatial into rows [M, Cin].  For H*W == 1 this is a pure (free)
    # reshape; only the general case needs an NCHW->NHWC transpose.
    if H * W == 1:
        x2d = x_nchw.reshape(M, Cin)
    else:
        x2d = jnp.transpose(x_nchw, (0, 2, 3, 1)).reshape(M, Cin)

    # Constant-ones column so the bias rides inside the single matmul
    # (one fewer HBM->VMEM DMA, no separate VPU add in the kernel).
    x_aug = jnp.concatenate([x2d, jnp.ones((M, 1), x2d.dtype)], axis=1)

    # Cost estimate with the REAL Cout (not the lane-padded one).
    flops = 2 * M * cin_aug * cout
    bytes_accessed = 4 * (M * cin_aug + cin_aug * cout + M * cout)
    cost = pl.CostEstimate(flops=flops, transcendentals=0, bytes_accessed=bytes_accessed)

    whole_bytes = 4 * M * (cin_aug + cout_pad)
    if whole_bytes <= _WHOLE_ARRAY_BYTES_LIMIT:
        # Tiny-M path: no grid, whole-array VMEM refs, single vmatmul push/pop.
        # Deliberately single-TensorCore (overhead-bound; megacore adds only a barrier).
        out2d = pl.pallas_call(
            _conv1x1_kernel,
            out_shape=jax.ShapeDtypeStruct((M, cout_pad), x_aug.dtype),
            in_specs=[
                pl.BlockSpec(memory_space=pltpu.MemorySpace.VMEM),
                pl.BlockSpec(memory_space=pltpu.MemorySpace.VMEM),
            ],
            out_specs=pl.BlockSpec(memory_space=pltpu.MemorySpace.VMEM),
            cost_estimate=cost,
        )(x_aug, w_aug)
    else:
        # Large-M guard (matters first on v7x's 64 MiB VMEM): tile rows instead of
        # whole-array refs so x/out stay under the scoped-VMEM limit.
        m_pad = pl.cdiv(M, TILE_M) * TILE_M
        if m_pad != M:
            x_aug = jnp.pad(x_aug, ((0, m_pad - M), (0, 0)))
        out2d = pl.pallas_call(
            _conv1x1_kernel,
            out_shape=jax.ShapeDtypeStruct((m_pad, cout_pad), x_aug.dtype),
            grid=(m_pad // TILE_M,),
            in_specs=[
                pl.BlockSpec((TILE_M, cin_aug), lambda i: (i, 0)),
                pl.BlockSpec((cin_aug, cout_pad), lambda i: (0, 0)),
            ],
            out_specs=pl.BlockSpec((TILE_M, cout_pad), lambda i: (i, 0)),
            compiler_params=pltpu.CompilerParams(dimension_semantics=("parallel",)),
            cost_estimate=cost,
        )(x_aug, w_aug)
        out2d = out2d[:M]

    # Drop lane padding and restore NCHW (free reshape when H*W == 1).
    out2d = out2d[:, :cout]
    if H * W == 1:
        return out2d.reshape(N, cout, 1, 1)
    return jnp.transpose(out2d.reshape(N, H, W, cout), (0, 3, 1, 2))


if __name__ == "__main__":
    key = jax.random.PRNGKey(0)
    k_x, k_w, k_b = jax.random.split(key, 3)

    # Input exactly as in the module: [1, 24, 1, 1]
    x37 = jax.random.normal(k_x, (1, 24, 1, 1), dtype=jnp.float32)

    # Deterministic synthetic parameters for Conv2d(24, 72, kernel_size=1)
    # (PyTorch shapes: weight [72, 24, 1, 1], bias [72])
    Cin, Cout = 24, 72
    bound = 1.0 / (Cin ** 0.5)
    weight = jax.random.uniform(k_w, (Cout, Cin, 1, 1), jnp.float32, -bound, bound)
    bias = jax.random.uniform(k_b, (Cout,), jnp.float32, -bound, bound)

    # One-time parameter prep (outside the per-call path).
    w_aug = jax.block_until_ready(prepare_params(weight, bias))

    forward = jax.jit(lambda x, w: conv2d_1x1(x, w, Cout))

    y = forward(x37, w_aug)
    y = jax.block_until_ready(y)

    # Sanity check against plain-JAX reference.
    ref = jnp.einsum("nchw,oc->nohw", x37, weight.reshape(Cout, Cin)) + bias.reshape(1, Cout, 1, 1)
    assert y.shape == (1, Cout, 1, 1)
    assert jnp.allclose(y, ref, atol=1e-5, rtol=1e-5)

    print("KERNEL_OK")
</pallas_src>

<mosaic_0001>
module attributes {stable_mosaic.version = 11 : i64} {
  func.func @_conv1x1_kernel(%arg0: memref<1x25xf32, #tpu.memory_space<vmem>>, %arg1: memref<25x128xf32, #tpu.memory_space<vmem>>, %arg2: memref<1x128xf32, #tpu.memory_space<vmem>>) attributes {dimension_semantics = [], scalar_prefetch = 0 : i64, scratch_operands = 0 : i64, tpu.core_type = #tpu.core_type<tc>} {
    %c0 = arith.constant 0 : index
    %c0_0 = arith.constant 0 : index
    %0 = vector.load %arg0[%c0, %c0_0] : memref<1x25xf32, #tpu.memory_space<vmem>>, vector<1x25xf32>
    %c0_1 = arith.constant 0 : index
    %c0_2 = arith.constant 0 : index
    %1 = vector.load %arg1[%c0_1, %c0_2] : memref<25x128xf32, #tpu.memory_space<vmem>>, vector<25x128xf32>
    %cst = arith.constant dense<0.000000e+00> : vector<1x128xf32>
    %2 = tpu.matmul %0, %1, %cst {dimension_numbers = #tpu.dot_dimension_numbers<[1], [0], [0], [1], [0, 0, 1, 1], [], []>} : vector<1x25xf32>, vector<25x128xf32>, vector<1x128xf32> -> vector<1x128xf32>
    %c0_3 = arith.constant 0 : index
    %c0_4 = arith.constant 0 : index
    %3 = vector.load %arg2[%c0_3, %c0_4] : memref<1x128xf32, #tpu.memory_space<vmem>>, vector<1x128xf32>
    tpu.vector_store %arg2[%c0_3, %c0_4], %2 {strides = array<i32>} : memref<1x128xf32, #tpu.memory_space<vmem>>, vector<1x128xf32>,
    return
  }
}

</mosaic_0001>

<llo_original>
// kernel: _lambda_.1
$region0: #{_lambda_.1}
  #allocation0 [shape = 'u32[]', space=smem, size = 0x4, offset = 0x4, fixed_abs, tag = 'smem constant byte address 0x4 - core index']
  #allocation1 [shape = 'u32[144,128]{1,0:T(1,128)}', space=vmem, size = 0x12000, scoped, tag = 'internal scratch']
  %s0 = inlined_call_operand.vmem [shape: f32[1,25], index: 0, kind: input, shape index: {}]
  %s1 = inlined_call_operand.hbm [shape: f32[25,128], index: 1, kind: input, shape index: {}]
  %s2 = inlined_call_operand.vmem [shape: f32[1,128], index: 2, kind: output, shape index: {}]
  %s3 = sld [smem:[#allocation0]]
  $region22: #{_lambda_.1} parent=0
    _
  %s5 = ssub.s32 1, %s3
  %s6 = scalar_select 0, %s5, %s3
  $region1: #{_lambda_.1} parent=0
    #allocation2 [shape = 'u8[16384]{0}', space=vmem, size = 0x4000, scoped, tag = 'input window, operand 1, single buffered']
    #allocation3 [shape = 's32[1]{0}', space=sflag, size = 0x4, scoped, tag = 'scoped memory for _lambda_.1']
    %7 = vsyncpa [#allocation3], 0
    // Predicated region
    $region2: #{_lambda_.1} parent=1 // pred_check
      _
    $region3: #{_lambda_.1} parent=1 // pred_check_branch
      %9 = sbr.rel (0) target = $region5
    $region4: #{_lambda_.1} parent=1 // pred_region
      _
    $region5: #{_lambda_.1} parent=1 // pred_fallthru
      _
    // Predicated region
    $region6: #{_lambda_.1} parent=1 // pred_check
      _
    $region7: #{_lambda_.1} parent=1 // pred_check_branch
      %11 = sbr.rel (0) target = $region9
    $region8: #{_lambda_.1} parent=1 // pred_region
      %s13 = ssub.s32 512, 512
      %14 = vsyncadd [#allocation3], %s13
      %s15 = sshll.u32 [#allocation2], 4
      %s16 = int_to_ptr.vmem [resolvable:$true] %s15
      %21 = dma.hbm_to_vmem [thread:$0]  %s1, 512, %s16, [#allocation3], 128, 128, 8
    $region9: #{_lambda_.1} parent=1 // pred_fallthru
      _
    // Predicated region
    $region10: #{_lambda_.1} parent=1 // pred_check
      _
    $region11: #{_lambda_.1} parent=1 // pred_check_branch
      %23 = sbr.rel (0) target = $region13
    $region12: #{_lambda_.1} parent=1 // pred_region
      %24 = dma.done [#allocation3], 512
    $region13: #{_lambda_.1} parent=1 // pred_fallthru
      _
    %v25 = vld [vmem:[%s0] sm:$0x1]
    %v26 = vld [vmem:[#allocation2] sm:$0xff]
    %v27 = vld [vmem:[#allocation2 + $0x8] sm:$0xff]
    %v28 = vld [vmem:[#allocation2 + $0x10] sm:$0xff]
    %v29 = vld [vmem:[#allocation2 + $0x18] sm:$0x1]
    %vm30 = vcmask 203776
    %v32 = vsel %vm30, %v25, 0
    %vm34 = vcmask 1040384
    %v36 = vsel %vm34, %v29, 0
    %38 = vmatprep.subr.mxu0 0.0
    %39 = vmatpush1.msra.mxu0 %v26
    %40 = vmatprep.subr.mxu0 0.0
    %41 = vmatpush1.msra.mxu0 %v27
    %42 = vmatprep.subr.mxu0 0.0
    %43 = vmatpush1.msra.mxu0 %v28
    %44 = vmatprep.subr.mxu0 0.0
    %45 = vmatpush1.msra.mxu0 %v36
    %46 = vmatprep.subr.mxu0 0.0
    %47 = vmatpush1.msra.mxu0 0.0
    %48 = vmatprep.subr.mxu0 0.0
    %49 = vmatpush1.msra.mxu0 0.0
    %50 = vmatprep.subr.mxu0 0.0
    %51 = vmatpush1.msra.mxu0 0.0
    %52 = vmatprep.subr.mxu0 0.0
    %53 = vmatpush1.msra.mxu0 0.0
    %54 = vmatprep.subr.mxu0 0.0
    %55 = vmatpush1.msra.mxu0 0.0
    %56 = vmatprep.subr.mxu0 0.0
    %57 = vmatpush1.msra.mxu0 0.0
    %58 = vmatprep.subr.mxu0 0.0
    %59 = vmatpush1.msra.mxu0 0.0
    %60 = vmatprep.subr.mxu0 0.0
    %61 = vmatpush1.msra.mxu0 0.0
    %62 = vmatprep.subr.mxu0 0.0
    %63 = vmatpush1.msra.mxu0 0.0
    %64 = vmatprep.subr.mxu0 0.0
    %65 = vmatpush1.msra.mxu0 0.0
    %66 = vmatprep.subr.mxu0 0.0
    %67 = vmatpush1.msra.mxu0 0.0
    %68 = vmatprep.subr.mxu0 0.0
    %69 = vmatpush1.msra.mxu0 0.0
    %70 = vmatprep.subr.mxu0 0.0
    %71 = vmatpush1.msra.mxu0 0.0
    %72 = vmatprep.subr.mxu0 0.0
    %73 = vmatpush1.msra.mxu0 0.0
    %74 = vmatprep.subr.mxu0 0.0
    %75 = vmatpush1.msra.mxu0 0.0
    %76 = vmatprep.subr.mxu0 0.0
    %77 = vmatpush1.msra.mxu0 0.0
    %78 = vmatprep.subr.mxu0 0.0
    %79 = vmatpush1.msra.mxu0 0.0
    %80 = vmatprep.subr.mxu0 0.0
    %81 = vmatpush1.msra.mxu0 0.0
    %82 = vmatprep.subr.mxu0 0.0
    %83 = vmatpush1.msra.mxu0 0.0
    %84 = vmatprep.subr.mxu0 0.0
    %85 = vmatpush1.msra.mxu0 0.0
    %86 = vmatprep.subr.mxu0 0.0
    %87 = vmatpush1.msra.mxu0 0.0
    %88 = vmatprep.subr.mxu0 0.0
    %89 = vmatpush1.msra.mxu0 0.0
    %90 = vmatprep.subr.mxu0 0.0
    %91 = vmatpush1.msra.mxu0 0.0
    %92 = vmatprep.subr.mxu0 0.0
    %93 = vmatpush1.msra.mxu0 0.0
    %94 = vmatprep.subr.mxu0 0.0
    %95 = vmatpush1.msra.mxu0 0.0
    %96 = vmatprep.subr.mxu0 0.0
    %97 = vmatpush1.msra.mxu0 0.0
    %98 = vmatprep.subr.mxu0 0.0
    %99 = vmatpush1.msra.mxu0 0.0
    %100 = vmatprep.subr.mxu0 0.0
    %101 = vmatpush1.msra.mxu0 0.0
    %102 = vmatprep.mubr.f32.mxu0 0.0
    %103 = vmatmul.mubr.f32.gmra.mrb[0].mxu0 %v32
    %v104 = vpop.f32.mrb[0].mxu0
    %v105 = vadd.f32 0.0, %v104
    %v106 = vpop.f32.mrb[0].mxu0
    %107 = vdwg.mxu0
    %108 = vst [vmem:[%s2] sm:$0x1] %v105
    // Predicated region
    $region14: #{_lambda_.1} parent=1 // pred_check
      _
    $region15: #{_lambda_.1} parent=1 // pred_check_branch
      %110 = sbr.rel (0) target = $region17
    $region16: #{_lambda_.1} parent=1 // pred_region
      _
    $region17: #{_lambda_.1} parent=1 // pred_fallthru
      _
    // Predicated region
    $region18: #{_lambda_.1} parent=1 // pred_check
      _
    $region19: #{_lambda_.1} parent=1 // pred_check_branch
      %112 = sbr.rel (0) target = $region21
    $region20: #{_lambda_.1} parent=1 // pred_region
      _
    $region21: #{_lambda_.1} parent=1 // pred_fallthru
      _
    %113 = vsyncpa [#allocation3], 1

</llo_original>
